<compile_context>
chip_gen: v6e
topology: v6e:2x2x1
jax: 0.10.0
libtpu: 0.0.40
codegen_flags: <defaults>
</compile_context>

<pallas_src>
import jax
import jax.numpy as jnp
from jax.experimental import pallas as pl
from jax.experimental.pallas import tpu as pltpu


def _round_up(n, m):
    return ((n + m - 1) // m) * m


# ---------------------------------------------------------------------------
# One-time parameter packing (all transposes, conv folding, block-diagonal
# construction and lane padding hoisted out of the per-call path).
# ---------------------------------------------------------------------------
def prepare_params(params, num_inputs, num_outputs, compute_dtype=jnp.float32):
    f32 = jnp.float32
    Ni, No = num_inputs, num_outputs
    h1 = params["wc1"].shape[0]
    h2 = params["wc2"].shape[0]

    # Lane-dense column count (>=128, multiple of 128).
    C = max(128, _round_up(max(2 * h1, 2 * h2, 1 + No), 128))

    SUB = 16  # sublane alignment valid for both f32 (8) and bf16 (16) tiling
    r_b1 = SUB
    r_w1 = _round_up(2 * Ni, SUB)
    r_w2 = C          # K of layer 2 == lane width of the hidden activation
    r_w3 = C
    r_b3 = SUB

    offs, off = {}, 0
    for name, r in (("b1", r_b1), ("w1", r_w1), ("w2", r_w2),
                    ("w3", r_w3), ("b3", r_b3)):
        offs[name] = off
        off += r
    rows = off

    buf = jnp.zeros((rows, C), f32)   # zero padding must stay zero (it does)

    wc1 = params["wc1"].astype(f32)            # (h1, Ni)
    wa1 = params["wa1"].astype(f32)
    wcc = params["wc_conv"].astype(f32)[0]     # (2,)
    wac = params["wa_conv"].astype(f32)[0]
    bcc = params["bc_conv"].astype(f32)[0, 0]
    bac = params["ba_conv"].astype(f32)[0, 0]

    # --- Layer 1 with Conv1d(2,1,1) folded in (critic cols 0:h1, actor h1:2h1)
    crit = (wcc[None, :, None] * wc1.T[:, None, :]).reshape(2 * Ni, h1)
    act = (wac[None, :, None] * wa1.T[:, None, :]).reshape(2 * Ni, h1)
    buf = buf.at[offs["w1"]:offs["w1"] + 2 * Ni, 0:h1].set(crit)
    buf = buf.at[offs["w1"]:offs["w1"] + 2 * Ni, h1:2 * h1].set(act)
    buf = buf.at[offs["b1"], 0:h1].set(bcc * wc1.sum(axis=1))
    buf = buf.at[offs["b1"], h1:2 * h1].set(bac * wa1.sum(axis=1))

    # --- Layer 2 / 3: block-diagonal, pre-transposed
    buf = buf.at[offs["w2"]:offs["w2"] + h1, 0:h2].set(params["wc2"].T.astype(f32))
    buf = buf.at[offs["w2"] + h1:offs["w2"] + 2 * h1, h2:2 * h2].set(
        params["wa2"].T.astype(f32))

    buf = buf.at[offs["w3"]:offs["w3"] + h2, 0:1].set(params["wc3"].T.astype(f32))
    buf = buf.at[offs["w3"] + h2:offs["w3"] + 2 * h2, 1:1 + No].set(
        params["wa3"].T.astype(f32))

    # --- fused final bias [bc3 | ba3] in lanes 0 .. No
    buf = buf.at[offs["b3"], 0:1].set(params["bc3"].astype(f32))
    buf = buf.at[offs["b3"], 1:1 + No].set(params["ba3"].astype(f32))

    meta = dict(Ni=Ni, h1=h1, h2=h2, No=No, offs=offs, rows=rows, cols=C)
    return buf.astype(compute_dtype), meta


# ---------------------------------------------------------------------------
# Batched kernel + wrapper.  X: (B, 2*Ni)  ->  probs (B, No), values (B, 1)
# ---------------------------------------------------------------------------
def make_a2c_forward(meta, *, b_tile=128, compute_dtype=jnp.float32):
    # B_tile guidance: 128 matches the v5e MXU granularity; 256+ is also fine
    # on v6e / v7x (VMEM is not a constraint at these sizes on any generation).
    Ni, No = meta["Ni"], meta["No"]
    C, rows, o = meta["cols"], meta["rows"], meta["offs"]
    Kx = 2 * Ni
    w_bytes = rows * C * jnp.dtype(compute_dtype).itemsize

    def kernel(x_ref, w_ref, out_ref):
        # x_ref: (b_tile, 2*Ni) raw interleaved states; w_ref: packed weights;
        # out_ref: (b_tile, C) lane-dense [value | probs | zeros].
        x = x_ref[...].astype(compute_dtype)

        w1 = w_ref[o["w1"]:o["w1"] + Kx, :]          # conv folded in
        b1 = w_ref[o["b1"]:o["b1"] + 1, :]
        h = jnp.dot(x, w1, preferred_element_type=jnp.float32) + b1
        h = jnp.maximum(h, 0.0).astype(compute_dtype)

        w2 = w_ref[o["w2"]:o["w2"] + C, :]
        h = jnp.dot(h, w2, preferred_element_type=jnp.float32)
        h = jnp.maximum(h, 0.0).astype(compute_dtype)

        w3 = w_ref[o["w3"]:o["w3"] + C, :]
        b3 = w_ref[o["b3"]:o["b3"] + 1, :]
        out_ref[...] = (jnp.dot(h, w3, preferred_element_type=jnp.float32)
                        + b3).astype(jnp.float32)

    @jax.jit
    def fwd(X, packed):
        B = X.shape[0]
        Bp = _round_up(B, b_tile)
        Xf = X.astype(jnp.float32)
        if Bp != B:                                  # static-shape padding
            Xf = jnp.pad(Xf, ((0, Bp - B), (0, 0)))
        nb = Bp // b_tile

        out = pl.pallas_call(
            kernel,
            out_shape=jax.ShapeDtypeStruct((Bp, C), jnp.float32),
            grid_spec=pltpu.PrefetchScalarGridSpec(
                num_scalar_prefetch=0,
                grid=(nb,),
                in_specs=[
                    pl.BlockSpec((b_tile, Kx), lambda b: (b, 0)),
                    # Constant index_map -> weights fetched once, stay resident.
                    pl.BlockSpec((rows, C), lambda b: (0, 0)),
                ],
                out_specs=pl.BlockSpec((b_tile, C), lambda b: (b, 0)),
            ),
            compiler_params=pltpu.CompilerParams(
                dimension_semantics=("parallel",)),
            cost_estimate=pl.CostEstimate(
                flops=2 * Bp * (Kx * C + 2 * C * C),
                transcendentals=0,
                bytes_accessed=w_bytes + Bp * (Kx + C) * 4,
            ),
        )(Xf, packed)

        values = out[:B, 0:1]
        probs = out[:B, 1:1 + No]
        return probs, values

    return fwd


def make_a2c_forward_single(meta, **kw):
    """Single-state forward, exactly the nn.Module forward(x) signature."""
    fwd_b = make_a2c_forward(meta, b_tile=8, **kw)
    Ni = meta["Ni"]

    @jax.jit
    def fwd(x, packed):
        probs, value = fwd_b(jnp.reshape(x, (1, 2 * Ni)), packed)
        return probs[0], value[0]

    return fwd


# ---------------------------------------------------------------------------
# Raw (PyTorch-layout) parameter init + pure-JAX reference (mirrors PyTorch).
# ---------------------------------------------------------------------------
def init_params(key, num_inputs, num_outputs, h1, h2):
    ks = jax.random.split(key, 12)
    u = lambda k, shape, fan_in: jax.random.uniform(
        k, shape, jnp.float32, -1.0 / jnp.sqrt(fan_in), 1.0 / jnp.sqrt(fan_in))
    return {
        "wc_conv": u(ks[0], (1, 2), 2.0), "bc_conv": u(ks[1], (1, 1), 2.0),
        "wc1": u(ks[2], (h1, num_inputs), num_inputs),
        "wc2": u(ks[3], (h2, h1), h1),
        "wc3": u(ks[4], (1, h2), h2), "bc3": u(ks[5], (1,), h2),
        "wa_conv": u(ks[6], (1, 2), 2.0), "ba_conv": u(ks[7], (1, 1), 2.0),
        "wa1": u(ks[8], (h1, num_inputs), num_inputs),
        "wa2": u(ks[9], (h2, h1), h1),
        "wa3": u(ks[10], (num_outputs, h2), h2),
        "ba3": u(ks[11], (num_outputs,), h2),
    }


def a2c_forward_ref(x, params, num_inputs, num_outputs):
    """Pure-JAX single-state reference, f32 at Precision.HIGHEST."""
    P = jax.lax.Precision.HIGHEST
    x2 = jnp.reshape(x.astype(jnp.float32), (num_inputs, 2))

    def branch(wc, bc, w1, w2, w3, b3):
        y = jnp.dot(x2, wc.T, precision=P) + bc[0, 0]   # Conv1d(2,1,1)
        y = y.reshape(-1)                               # Flatten(start_dim=0)
        h = jnp.maximum(jnp.dot(y, w1.T, precision=P), 0.0)
        h = jnp.maximum(jnp.dot(h, w2.T, precision=P), 0.0)
        return jnp.dot(h, w3.T, precision=P) + b3

    value = branch(params["wc_conv"], params["bc_conv"],
                   params["wc1"], params["wc2"], params["wc3"], params["bc3"])
    probs = branch(params["wa_conv"], params["ba_conv"],
                   params["wa1"], params["wa2"], params["wa3"], params["ba3"])
    return probs, value


if __name__ == "__main__":
    num_inputs = 16      # Linear(num_inputs, hidden1) input size
    num_outputs = 4      # action space size
    hidden1, hidden2 = 32, 32   # layer_size=[32, 32]
    B = 256              # batched rollout states
    B_TILE = 128

    key = jax.random.PRNGKey(0)
    k_x, k_p = jax.random.split(key)
    params = init_params(k_p, num_inputs, num_outputs, hidden1, hidden2)
    # Each row is one state with 2*num_inputs elements (reshaped (-1,2,1) in torch).
    X = jax.random.normal(k_x, (B, 2 * num_inputs), dtype=jnp.float32)

    probs_ref, values_ref = jax.vmap(
        lambda r: a2c_forward_ref(r, params, num_inputs, num_outputs))(X)

    # Tolerances: TPU default matmul precision uses bf16-based MXU passes and
    # the conv-fold changes rounding order vs. the reference, so the f32 check
    # uses 1e-2; bf16 weights (v6e/v7x recommendation) use 5e-2 absolute.

    # ---- f32 weights ----
    packed32, meta = prepare_params(params, num_inputs, num_outputs, jnp.float32)
    fwd32 = make_a2c_forward(meta, b_tile=B_TILE, compute_dtype=jnp.float32)
    probs32, values32 = fwd32(X, packed32)
    jax.block_until_ready((probs32, values32))
    assert probs32.shape == (B, num_outputs) and values32.shape == (B, 1)
    assert jnp.allclose(probs32, probs_ref, atol=1e-2, rtol=1e-2)
    assert jnp.allclose(values32, values_ref, atol=1e-2, rtol=1e-2)

    # ---- bf16 weights/activations (halves weight DMA, native MXU on v6e/v7x)
    packed16, meta16 = prepare_params(params, num_inputs, num_outputs, jnp.bfloat16)
    fwd16 = make_a2c_forward(meta16, b_tile=B_TILE, compute_dtype=jnp.bfloat16)
    probs16, values16 = fwd16(X, packed16)
    jax.block_until_ready((probs16, values16))
    assert jnp.allclose(probs16, probs_ref, atol=5e-2, rtol=0.0)
    assert jnp.allclose(values16, values_ref, atol=5e-2, rtol=0.0)

    # ---- single-state forward (the literal nn.Module forward(x)) ----
    fwd_single = make_a2c_forward_single(meta, compute_dtype=jnp.float32)
    p1, v1 = fwd_single(X[0], packed32)
    jax.block_until_ready((p1, v1))
    assert p1.shape == (num_outputs,) and v1.shape == (1,)
    assert jnp.allclose(p1, probs_ref[0], atol=1e-2, rtol=1e-2)
    assert jnp.allclose(v1, values_ref[0], atol=1e-2, rtol=1e-2)

    print("KERNEL_OK")
</pallas_src>

<mosaic_0001>
module attributes {stable_mosaic.version = 11 : i64} {
  func.func @kernel(%arg0: i32, %arg1: memref<128x32xf32, #tpu.memory_space<vmem>>, %arg2: memref<320x128xf32, #tpu.memory_space<vmem>>, %arg3: memref<128x128xf32, #tpu.memory_space<vmem>>) attributes {dimension_semantics = [#tpu.dimension_semantics<parallel>], iteration_bounds = array<i64: 2>, scalar_prefetch = 0 : i64, scratch_operands = 0 : i64, tpu.core_type = #tpu.core_type<tc>, window_params = [{transform_indices = @transform_0, window_bounds = array<i64: 128, 32>}, {pipeline_mode = #tpu.pipeline_mode<synchronous>, transform_indices = @transform_1, window_bounds = array<i64: 320, 128>}, {transform_indices = @transform_2, window_bounds = array<i64: 128, 128>}]} {
    %c0 = arith.constant 0 : index
    %c0_0 = arith.constant 0 : index
    %0 = vector.load %arg1[%c0, %c0_0] : memref<128x32xf32, #tpu.memory_space<vmem>>, vector<128x32xf32>
    %c16 = arith.constant 16 : index
    %c0_1 = arith.constant 0 : index
    %1 = vector.load %arg2[%c16, %c0_1] : memref<320x128xf32, #tpu.memory_space<vmem>>, vector<32x128xf32>
    %c0_2 = arith.constant 0 : index
    %c0_3 = arith.constant 0 : index
    %2 = vector.load %arg2[%c0_2, %c0_3] : memref<320x128xf32, #tpu.memory_space<vmem>>, vector<1x128xf32>
    %cst = arith.constant dense<0.000000e+00> : vector<128x128xf32>
    %3 = tpu.matmul %0, %1, %cst {dimension_numbers = #tpu.dot_dimension_numbers<[1], [0], [0], [1], [0, 0, 1, 1], [], []>} : vector<128x32xf32>, vector<32x128xf32>, vector<128x128xf32> -> vector<128x128xf32>
    %4 = vector.broadcast %2 : vector<1x128xf32> to vector<128x128xf32>
    %5 = arith.addf %3, %4 : vector<128x128xf32>
    %cst_4 = arith.constant 0.000000e+00 : f32
    %6 = vector.broadcast %cst_4 : f32 to vector<128x128xf32>
    %7 = arith.maximumf %5, %6 : vector<128x128xf32>
    %c48 = arith.constant 48 : index
    %c0_5 = arith.constant 0 : index
    %8 = vector.load %arg2[%c48, %c0_5] : memref<320x128xf32, #tpu.memory_space<vmem>>, vector<128x128xf32>
    %cst_6 = arith.constant dense<0.000000e+00> : vector<128x128xf32>
    %9 = tpu.matmul %7, %8, %cst_6 {dimension_numbers = #tpu.dot_dimension_numbers<[1], [0], [0], [1], [0, 0, 1, 1], [], []>} : vector<128x128xf32>, vector<128x128xf32>, vector<128x128xf32> -> vector<128x128xf32>
    %cst_7 = arith.constant 0.000000e+00 : f32
    %10 = vector.broadcast %cst_7 : f32 to vector<128x128xf32>
    %11 = arith.maximumf %9, %10 : vector<128x128xf32>
    %c176 = arith.constant 176 : index
    %c0_8 = arith.constant 0 : index
    %12 = vector.load %arg2[%c176, %c0_8] : memref<320x128xf32, #tpu.memory_space<vmem>>, vector<128x128xf32>
    %c304 = arith.constant 304 : index
    %c0_9 = arith.constant 0 : index
    %13 = vector.load %arg2[%c304, %c0_9] : memref<320x128xf32, #tpu.memory_space<vmem>>, vector<1x128xf32>
    %cst_10 = arith.constant dense<0.000000e+00> : vector<128x128xf32>
    %14 = tpu.matmul %11, %12, %cst_10 {dimension_numbers = #tpu.dot_dimension_numbers<[1], [0], [0], [1], [0, 0, 1, 1], [], []>} : vector<128x128xf32>, vector<128x128xf32>, vector<128x128xf32> -> vector<128x128xf32>
    %15 = vector.broadcast %13 : vector<1x128xf32> to vector<128x128xf32>
    %16 = arith.addf %14, %15 : vector<128x128xf32>
    %c0_11 = arith.constant 0 : index
    %c0_12 = arith.constant 0 : index
    %17 = vector.load %arg3[%c0_11, %c0_12] : memref<128x128xf32, #tpu.memory_space<vmem>>, vector<128x128xf32>
    tpu.vector_store %arg3[%c0_11, %c0_12], %16 {strides = array<i32>} : memref<128x128xf32, #tpu.memory_space<vmem>>, vector<128x128xf32>,
    return
  }
  func.func @transform_0(%arg0: i32) -> (i32, i32) {
    %c0_i32 = arith.constant 0 : i32
    %c0_i32_0 = arith.constant 0 : i32
    return %arg0, %c0_i32 : i32, i32
  }
  func.func @transform_1(%arg0: i32) -> (i32, i32) {
    %c0_i32 = arith.constant 0 : i32
    %c0_i32_0 = arith.constant 0 : i32
    %c0_i32_1 = arith.constant 0 : i32
    return %c0_i32, %c0_i32_0 : i32, i32
  }
  func.func @transform_2(%arg0: i32) -> (i32, i32) {
    %c0_i32 = arith.constant 0 : i32
    %c0_i32_0 = arith.constant 0 : i32
    return %arg0, %c0_i32 : i32, i32
  }
}

</mosaic_0001>

<llo_original>
// kernel: fwd.1
$region0: #{fwd.1}
  #allocation0 [shape = 'u32[]', space=smem, size = 0x4, offset = 0x4, fixed_abs, tag = 'smem constant byte address 0x4 - core index']
  #allocation1 [shape = 'u32[144,128]{1,0:T(1,128)}', space=vmem, size = 0x12000, scoped, tag = 'internal scratch']
  %s0 = inlined_call_operand.vmem [shape: f32[256,32], index: 0, kind: input, shape index: {}]
  %s1 = inlined_call_operand.vmem [shape: f32[320,128], index: 1, kind: input, shape index: {}]
  %s2 = inlined_call_operand.vmem [shape: f32[256,128], index: 2, kind: output, shape index: {}]
  %s3 = sld [smem:[#allocation0]]
  $region41: #{fwd.1} parent=0
    _
  %s5 = ssub.s32 1, %s3
  %s6 = scalar_select 0, %s5, %s3
  loop: start=0, step=1, limit=4
  $region2: #{fwd.1} parent=0 // loop_pre_header
    _
  $region3: #{fwd.1} parent=0 // loop_header
    %s8 = sphi 0, %s12
    %p9 = scmp.ge.s32.totalorder %s8, 4
    %s18 = sphi 0, %s20
    %s21 = sphi 0, %s18
    %s22 = sphi 0, %s21
    %s38 = sphi 0, %s22
    %s42 = sphi 0, %s42
    %s44 = sphi 0, %s42
    %s45 = sphi 0, %s44
    %s59 = sphi 0, %s45
    %s65 = sphi 0, %s67
    %s68 = sphi 0, %s65
    %s69 = sphi 0, %s68
    %s85 = sphi 0, %s69
  $region4: #{fwd.1} parent=0 // loop_header_branch
    %11 = sbr.rel (%p9) target = $region8
  $region5: #{fwd.1} parent=0 // loop_body
    %s13 = ssub.s32 %s8, 1
    %s14 = ssub.s32 %s8, 2
    %s15 = sadd.s32 %s8, 1
    %s16 = ssub.s32 %s8, %s15
    %p17 = scmp.eq.s32.totalorder %s16, 0
    %s19 = sadd.s32 %s18, 1
    %s20 = scalar_select %p17, %s18, %s19
    %p23 = pneg %p17
    %p24 = scmp.eq.s32.totalorder %s8, 1
    %p25 = por %p23, %p24
    %p26 = scmp.ne.s32.totalorder %s18, %s21
    %p27 = scmp.eq.s32.totalorder %s8, 0
    %p28 = por %p26, %p27
    %p29 = scmp.ne.s32.totalorder %s18, %s21
    %p30 = scmp.eq.s32.totalorder %s13, 1
    %p31 = por %p29, %p30
    %p32 = scmp.ne.s32.totalorder %s21, %s22
    %p33 = scmp.eq.s32.totalorder %s13, 0
    %p34 = por %p32, %p33
    %p35 = scmp.ne.s32.totalorder %s21, %s22
    %p36 = scmp.eq.s32.totalorder %s14, 1
    %p37 = por %p35, %p36
    %p39 = scmp.ne.s32.totalorder %s22, %s38
    %p40 = scmp.eq.s32.totalorder %s14, 0
    %p41 = por %p39, %p40
    %s43 = sadd.s32 %s42, 1
    %p46 = scmp.eq.s32.totalorder %s8, 1
    %p47 = scmp.ne.s32.totalorder %s42, %s44
    %p48 = scmp.eq.s32.totalorder %s8, 0
    %p49 = por %p47, %p48
    %p50 = scmp.ne.s32.totalorder %s42, %s44
    %p51 = scmp.eq.s32.totalorder %s13, 1
    %p52 = por %p50, %p51
    %p53 = scmp.ne.s32.totalorder %s44, %s45
    %p54 = scmp.eq.s32.totalorder %s13, 0
    %p55 = por %p53, %p54
    %p56 = scmp.ne.s32.totalorder %s44, %s45
    %p57 = scmp.eq.s32.totalorder %s14, 1
    %p58 = por %p56, %p57
    %p60 = scmp.ne.s32.totalorder %s45, %s59
    %p61 = scmp.eq.s32.totalorder %s14, 0
    %p62 = por %p60, %p61
    %s63 = ssub.s32 %s8, %s15
    %p64 = scmp.eq.s32.totalorder %s63, 0
    %s66 = sadd.s32 %s65, 1
    %s67 = scalar_select %p64, %s65, %s66
    %p70 = pneg %p64
    %p71 = scmp.eq.s32.totalorder %s8, 1
    %p72 = por %p70, %p71
    %p73 = scmp.ne.s32.totalorder %s65, %s68
    %p74 = scmp.eq.s32.totalorder %s8, 0
    %p75 = por %p73, %p74
    %p76 = scmp.ne.s32.totalorder %s65, %s68
    %p77 = scmp.eq.s32.totalorder %s13, 1
    %p78 = por %p76, %p77
    %p79 = scmp.ne.s32.totalorder %s68, %s69
    %p80 = scmp.eq.s32.totalorder %s13, 0
    %p81 = por %p79, %p80
    %p82 = scmp.ne.s32.totalorder %s68, %s69
    %p83 = scmp.eq.s32.totalorder %s14, 1
    %p84 = por %p82, %p83
    %p86 = scmp.ne.s32.totalorder %s69, %s85
    %p87 = scmp.eq.s32.totalorder %s14, 0
    %p88 = por %p86, %p87
    %p89 = scmp.le.s32.totalorder 1, %s8
    %p90 = scmp.lt.s32.totalorder %s8, 3
    %p91 = pnand %p89, %p90
    %p92 = pneg %p91
    // Predicated region
    $region9: #{fwd.1} parent=5 // pred_check
      _
    $region10: #{fwd.1} parent=5 // pred_check_branch
      %94 = sbr.rel (%p91) target = $region12
    $region11: #{fwd.1} parent=5 // pred_region
      %s95 = ssub.s32 %s8, 1
      // Predicated region
      $region13: #{fwd.1} parent=11 // pred_check
        %p96 = pneg %p55
      $region14: #{fwd.1} parent=11 // pred_check_branch
        %98 = sbr.rel (%p96) target = $region16
      $region15: #{fwd.1} parent=11 // pred_region
        _
      $region16: #{fwd.1} parent=11 // pred_fallthru
        _
    $region12: #{fwd.1} parent=5 // pred_fallthru
      _
    %p99 = scmp.lt.s32.totalorder %s8, 2
    // Predicated region
    $region17: #{fwd.1} parent=5 // pred_check
      %p100 = pneg %p99
    $region18: #{fwd.1} parent=5 // pred_check_branch
      %102 = sbr.rel (%p100) target = $region20
    $region19: #{fwd.1} parent=5 // pred_region
      // Predicated region
      $region21: #{fwd.1} parent=19 // pred_check
        %p103 = pneg %p28
      $region22: #{fwd.1} parent=19 // pred_check_branch
        %105 = sbr.rel (%p103) target = $region24
      $region23: #{fwd.1} parent=19 // pred_region
        %s106 = smul.u32 16, %s8
        %p107 = scmp.lt.s32.totalorder %s106, 31
        %s108 = scalar_select %p107, %s106, 31
        %s109 = smul.addr %s108, 8
        %s110 = scalar_lea.vmem %s0, %s109
        %s111 = smul.u32 16, %s8
      $region24: #{fwd.1} parent=19 // pred_fallthru
        _
    $region20: #{fwd.1} parent=5 // pred_fallthru
      _
    %p112 = scmp.le.s32.totalorder 1, %s8
    %p113 = scmp.lt.s32.totalorder %s8, 3
    %p114 = pnand %p112, %p113
    %p115 = pneg %p114
    // Predicated region
    $region25: #{fwd.1} parent=5 // pred_check
      _
    $region26: #{fwd.1} parent=5 // pred_check_branch
      %117 = sbr.rel (%p114) target = $region28
    $region27: #{fwd.1} parent=5 // pred_region
      %s118 = ssub.s32 %s8, 1
      %s119 = smul.u32 16, %s13
      %p120 = scmp.lt.s32.totalorder %s119, 31
      %s121 = scalar_select %p120, %s119, 31
      %s122 = smul.addr %s121, 8
      %s123 = scalar_lea.vmem %s0, %s122
      %p124 = pneg %p34
      %p125 = pneg %p31
      %p126 = pneg %p55
      %p127 = pneg %p52
      %p128 = pneg %p81
      %p129 = pneg %p78
      %s130 = smul.u32 16, %s13
      %p131 = scmp.lt.s32.totalorder %s130, 31
      %s132 = scalar_select %p131, %s130, 31
      %s133 = smul.addr %s132, 8
      %s134 = scalar_lea.vmem %s2, %s133
      %s135 = smul.u32 16, %s13
      %p136 = scmp.lt.s32.totalorder %s135, 31
      %s137 = scalar_select %p136, %s135, 31
      %s138 = smul.addr %s137, 8
      %s139 = scalar_lea.vmem %s0, %s138
      %s140 = smul.u32 16, %s13
      %s141 = smul.u32 16, %s13
      %p142 = scmp.lt.s32.totalorder %s141, 31
      %s143 = scalar_select %p142, %s141, 31
      %s144 = smul.addr %s143, 8
      %s145 = scalar_lea.vmem %s2, %s144
      %s146 = smul.u32 16, %s13
      %v147 = vld [vmem:[%s139] sm:$0xff]
      %v148 = vld [vmem:[%s139 + $0x8] sm:$0xff]
      %v149 = vld [vmem:[%s139 + $0x10] sm:$0xff]
      %v150 = vld [vmem:[%s139 + $0x18] sm:$0xff]
      %v151 = vld [vmem:[%s139 + $0x20] sm:$0xff]
      %v152 = vld [vmem:[%s139 + $0x28] sm:$0xff]
      %v153 = vld [vmem:[%s139 + $0x30] sm:$0xff]
      %v154 = vld [vmem:[%s139 + $0x38] sm:$0xff]
      %v155 = vld [vmem:[%s139 + $0x40] sm:$0xff]
      %v156 = vld [vmem:[%s139 + $0x48] sm:$0xff]
      %v157 = vld [vmem:[%s139 + $0x50] sm:$0xff]
      %v158 = vld [vmem:[%s139 + $0x58] sm:$0xff]
      %v159 = vld [vmem:[%s139 + $0x60] sm:$0xff]
      %v160 = vld [vmem:[%s139 + $0x68] sm:$0xff]
      %v161 = vld [vmem:[%s139 + $0x70] sm:$0xff]
      %v162 = vld [vmem:[%s139 + $0x78] sm:$0xff]
      %v163 = vld [vmem:[%s1 + $0x10] sm:$0xff]
      %v164 = vld [vmem:[%s1 + $0x18] sm:$0xff]
      %v165 = vld [vmem:[%s1 + $0x20] sm:$0xff]
      %v166 = vld [vmem:[%s1 + $0x28] sm:$0xff]
      %v167 = vld [vmem:[%s1] sm:$0x1]
      %v168 = vlaneseq
      %v169 = vshrl.u32 %v168, 7
      %v170 = vsub.s32 0, %v169
      %v171 = vrot.slane %v167, %v170
      %vm172 = vcmask 261120
      %v174 = vsel %vm172, %v147, 0
      %v177 = vsel %vm172, %v148, 0
      %v180 = vsel %vm172, %v149, 0
      %v183 = vsel %vm172, %v150, 0
      %v186 = vsel %vm172, %v151, 0
      %v189 = vsel %vm172, %v152, 0
      %v192 = vsel %vm172, %v153, 0
      %v195 = vsel %vm172, %v154, 0
      %v198 = vsel %vm172, %v155, 0
      %v201 = vsel %vm172, %v156, 0
      %v204 = vsel %vm172, %v157, 0
      %v207 = vsel %vm172, %v158, 0
      %v210 = vsel %vm172, %v159, 0
      %v213 = vsel %vm172, %v160, 0
      %v216 = vsel %vm172, %v161, 0
      %v219 = vsel %vm172, %v162, 0
      %221 = vmatprep.subr.mxu0 0.0
      %222 = vmatpush1.msra.mxu0 0.0
      %223 = vmatprep.subr.mxu0 0.0
      %224 = vmatpush1.msra.mxu0 0.0
      %225 = vmatprep.subr.mxu0 0.0
      %226 = vmatpush1.msra.mxu0 0.0
      %227 = vmatprep.subr.mxu0 0.0
      %228 = vmatpush1.msra.mxu0 0.0
      %229 = vmatprep.subr.mxu0 0.0
      %230 = vmatpush1.msra.mxu0 0.0
      %231 = vmatprep.subr.mxu0 0.0
      %232 = vmatpush1.msra.mxu0 0.0
      %233 = vmatprep.subr.mxu0 0.0
      %234 = vmatpush1.msra.mxu0 0.0
      %235 = vmatprep.subr.mxu0 0.0
      %236 = vmatpush1.msra.mxu0 0.0
      %237 = vmatprep.subr.mxu0 0.0
      %238 = vmatpush1.msra.mxu0 0.0
      %239 = vmatprep.subr.mxu0 0.0
      %240 = vmatpush1.msra.mxu0 0.0
      %241 = vmatprep.subr.mxu0 0.0
      %242 = vmatpush1.msra.mxu0 0.0
      %243 = vmatprep.subr.mxu0 0.0
      %244 = vmatpush1.msra.mxu0 0.0
      %245 = vmatprep.subr.mxu0 0.0
      %246 = vmatpush1.msra.mxu0 %v166
      %247 = vmatprep.subr.mxu0 0.0
      %248 = vmatpush1.msra.mxu0 %v165
      %249 = vmatprep.subr.mxu0 0.0
      %250 = vmatpush1.msra.mxu0 %v164
      %251 = vmatprep.subr.mxu0 0.0
      %252 = vmatpush1.msra.mxu0 %v163
      %253 = vmatprep.subr.mxu0 0.0
      %254 = vmatpush2.msra.mxu0 0.0
      %255 = vmatprep.subr.mxu0 0.0
      %256 = vmatpush2.msra.mxu0 0.0
      %257 = vmatprep.subr.mxu0 0.0
      %258 = vmatpush2.msra.mxu0 0.0
      %259 = vmatprep.subr.mxu0 0.0
      %260 = vmatpush2.msra.mxu0 0.0
      %261 = vmatprep.subr.mxu0 0.0
      %262 = vmatpush2.msra.mxu0 0.0
      %263 = vmatprep.subr.mxu0 0.0
      %264 = vmatpush2.msra.mxu0 0.0
      %265 = vmatprep.subr.mxu0 0.0
      %266 = vmatpush2.msra.mxu0 0.0
      %267 = vmatprep.subr.mxu0 0.0
      %268 = vmatpush2.msra.mxu0 0.0
      %269 = vmatprep.subr.mxu0 0.0
      %270 = vmatpush2.msra.mxu0 0.0
      %271 = vmatprep.subr.mxu0 0.0
      %272 = vmatpush2.msra.mxu0 0.0
      %273 = vmatprep.subr.mxu0 0.0
      %274 = vmatpush2.msra.mxu0 0.0
      %275 = vmatprep.subr.mxu0 0.0
      %276 = vmatpush2.msra.mxu0 0.0
      %277 = vmatprep.subr.mxu0 0.0
      %278 = vmatpush2.msra.mxu0 0.0
      %279 = vmatprep.subr.mxu0 0.0
      %280 = vmatpush2.msra.mxu0 0.0
      %281 = vmatprep.subr.mxu0 0.0
      %282 = vmatpush2.msra.mxu0 0.0
      %283 = vmatprep.subr.mxu0 0.0
      %284 = vmatpush2.msra.mxu0 0.0
      %285 = vmatprep.mubr.f32.mxu0 0.0
      %286 = vmatmul.mubr.f32.gmra.mxu0 %v174
      %v287 = vpop.f32.mrf.mxu0
      %v288 = vadd.f32 %v171, %v287
      %v289 = vpop.f32.mrf.mxu0
      %290 = vmatprep.mubr.f32.mxu0 0.0
      %291 = vmatmul.mubr.f32.gmra.mxu0 %v177
      %v292 = vpop.f32.mrf.mxu0
      %v293 = vadd.f32 %v171, %v292
      %v294 = vpop.f32.mrf.mxu0
      %295 = vmatprep.mubr.f32.mxu0 0.0
      %296 = vmatmul.mubr.f32.gmra.mxu0 %v180
      %v297 = vpop.f32.mrf.mxu0
      %v298 = vadd.f32 %v171, %v297
      %v299 = vpop.f32.mrf.mxu0
      %300 = vmatprep.mubr.f32.mxu0 0.0
      %301 = vmatmul.mubr.f32.gmra.mxu0 %v183
      %v302 = vpop.f32.mrf.mxu0
      %v303 = vadd.f32 %v171, %v302
      %v304 = vpop.f32.mrf.mxu0
      %305 = vmatprep.mubr.f32.mxu0 0.0
      %306 = vmatmul.mubr.f32.gmra.mxu0 %v186
      %v307 = vpop.f32.mrf.mxu0
      %v308 = vadd.f32 %v171, %v307
      %v309 = vpop.f32.mrf.mxu0
      %310 = vmatprep.mubr.f32.mxu0 0.0
      %311 = vmatmul.mubr.f32.gmra.mxu0 %v189
      %v312 = vpop.f32.mrf.mxu0
      %v313 = vadd.f32 %v171, %v312
      %v314 = vpop.f32.mrf.mxu0
      %315 = vmatprep.mubr.f32.mxu0 0.0
      %316 = vmatmul.mubr.f32.gmra.mxu0 %v192
      %v317 = vpop.f32.mrf.mxu0
      %v318 = vadd.f32 %v171, %v317
      %v319 = vpop.f32.mrf.mxu0
      %320 = vmatprep.mubr.f32.mxu0 0.0
      %321 = vmatmul.mubr.f32.gmra.mxu0 %v195
      %v322 = vpop.f32.mrf.mxu0
      %v323 = vadd.f32 %v171, %v322
      %v324 = vpop.f32.mrf.mxu0
      %325 = vmatprep.mubr.f32.mxu0 0.0
      %326 = vmatmul.mubr.f32.gmra.mxu0 %v198
      %v327 = vpop.f32.mrf.mxu0
      %v328 = vadd.f32 %v171, %v327
      %v329 = vpop.f32.mrf.mxu0
      %330 = vmatprep.mubr.f32.mxu0 0.0
      %331 = vmatmul.mubr.f32.gmra.mxu0 %v201
      %v332 = vpop.f32.mrf.mxu0
      %v333 = vadd.f32 %v171, %v332
      %v334 = vpop.f32.mrf.mxu0
      %335 = vmatprep.mubr.f32.mxu0 0.0
      %336 = vmatmul.mubr.f32.gmra.mxu0 %v204
      %v337 = vpop.f32.mrf.mxu0
      %v338 = vadd.f32 %v171, %v337
      %v339 = vpop.f32.mrf.mxu0
      %340 = vmatprep.mubr.f32.mxu0 0.0
      %341 = vmatmul.mubr.f32.gmra.mxu0 %v207
      %v342 = vpop.f32.mrf.mxu0
      %v343 = vadd.f32 %v171, %v342
      %v344 = vpop.f32.mrf.mxu0
      %345 = vmatprep.mubr.f32.mxu0 0.0
      %346 = vmatmul.mubr.f32.gmra.mxu0 %v210
      %v347 = vpop.f32.mrf.mxu0
      %v348 = vadd.f32 %v171, %v347
      %v349 = vpop.f32.mrf.mxu0
      %350 = vmatprep.mubr.f32.mxu0 0.0
      %351 = vmatmul.mubr.f32.gmra.mxu0 %v213
      %v352 = vpop.f32.mrf.mxu0
      %v353 = vadd.f32 %v171, %v352
      %v354 = vpop.f32.mrf.mxu0
      %355 = vmatprep.mubr.f32.mxu0 0.0
      %356 = vmatmul.mubr.f32.gmra.mxu0 %v216
      %v357 = vpop.f32.mrf.mxu0
      %v358 = vadd.f32 %v171, %v357
      %v359 = vpop.f32.mrf.mxu0
      %360 = vmatprep.mubr.f32.mxu0 0.0
      %361 = vmatmul.mubr.f32.gmra.mxu0 %v219
      %v362 = vpop.f32.mrf.mxu0
      %v363 = vadd.f32 %v171, %v362
      %v364 = vpop.f32.mrf.mxu0
      %365 = vdwg.mxu0
      %v366 = vmax.f32 %v288, 0.0
      %v367 = vmax.f32 %v293, 0.0
      %v368 = vmax.f32 %v298, 0.0
      %v369 = vmax.f32 %v303, 0.0
      %v370 = vmax.f32 %v308, 0.0
      %v371 = vmax.f32 %v313, 0.0
      %v372 = vmax.f32 %v318, 0.0
      %v373 = vmax.f32 %v323, 0.0
      %v374 = vmax.f32 %v328, 0.0
      %v375 = vmax.f32 %v333, 0.0
      %v376 = vmax.f32 %v338, 0.0
      %v377 = vmax.f32 %v343, 0.0
      %v378 = vmax.f32 %v348, 0.0
      %v379 = vmax.f32 %v353, 0.0
      %v380 = vmax.f32 %v358, 0.0
      %v381 = vmax.f32 %v363, 0.0
      %v382 = vld [vmem:[%s1 + $0x30] sm:$0xff]
      %v383 = vld [vmem:[%s1 + $0x38] sm:$0xff]
      %v384 = vld [vmem:[%s1 + $0x40] sm:$0xff]
      %v385 = vld [vmem:[%s1 + $0x48] sm:$0xff]
      %v386 = vld [vmem:[%s1 + $0x50] sm:$0xff]
      %v387 = vld [vmem:[%s1 + $0x58] sm:$0xff]
      %v388 = vld [vmem:[%s1 + $0x60] sm:$0xff]
      %v389 = vld [vmem:[%s1 + $0x68] sm:$0xff]
      %v390 = vld [vmem:[%s1 + $0x70] sm:$0xff]
      %v391 = vld [vmem:[%s1 + $0x78] sm:$0xff]
      %v392 = vld [vmem:[%s1 + $0x80] sm:$0xff]
      %v393 = vld [vmem:[%s1 + $0x88] sm:$0xff]
      %v394 = vld [vmem:[%s1 + $0x90] sm:$0xff]
      %v395 = vld [vmem:[%s1 + $0x98] sm:$0xff]
      %v396 = vld [vmem:[%s1 + $0xa0] sm:$0xff]
      %v397 = vld [vmem:[%s1 + $0xa8] sm:$0xff]
      %398 = vmatprep.subr.mxu0 0.0
      %399 = vmatpush1.msra.mxu0 %v397
      %400 = vmatprep.subr.mxu0 0.0
      %401 = vmatpush1.msra.mxu0 %v396
      %402 = vmatprep.subr.mxu0 0.0
      %403 = vmatpush1.msra.mxu0 %v395
      %404 = vmatprep.subr.mxu0 0.0
      %405 = vmatpush1.msra.mxu0 %v394
      %406 = vmatprep.subr.mxu0 0.0
      %407 = vmatpush1.msra.mxu0 %v393
      %408 = vmatprep.subr.mxu0 0.0
      %409 = vmatpush1.msra.mxu0 %v392
      %410 = vmatprep.subr.mxu0 0.0
      %411 = vmatpush1.msra.mxu0 %v391
      %412 = vmatprep.subr.mxu0 0.0
      %413 = vmatpush1.msra.mxu0 %v390
      %414 = vmatprep.subr.mxu0 0.0
      %415 = vmatpush1.msra.mxu0 %v389
      %416 = vmatprep.subr.mxu0 0.0
      %417 = vmatpush1.msra.mxu0 %v388
      %418 = vmatprep.subr.mxu0 0.0
      %419 = vmatpush1.msra.mxu0 %v387
      %420 = vmatprep.subr.mxu0 0.0
      %421 = vmatpush1.msra.mxu0 %v386
      %422 = vmatprep.subr.mxu0 0.0
      %423 = vmatpush1.msra.mxu0 %v385
      %424 = vmatprep.subr.mxu0 0.0
      %425 = vmatpush1.msra.mxu0 %v384
      %426 = vmatprep.subr.mxu0 0.0
      %427 = vmatpush1.msra.mxu0 %v383
      %428 = vmatprep.subr.mxu0 0.0
      %429 = vmatpush1.msra.mxu0 %v382
      %430 = vmatprep.subr.mxu0 0.0
      %431 = vmatpush2.msra.mxu0 0.0
      %432 = vmatprep.subr.mxu0 0.0
      %433 = vmatpush2.msra.mxu0 0.0
      %434 = vmatprep.subr.mxu0 0.0
      %435 = vmatpush2.msra.mxu0 0.0
      %436 = vmatprep.subr.mxu0 0.0
      %437 = vmatpush2.msra.mxu0 0.0
      %438 = vmatprep.subr.mxu0 0.0
      %439 = vmatpush2.msra.mxu0 0.0
      %440 = vmatprep.subr.mxu0 0.0
      %441 = vmatpush2.msra.mxu0 0.0
      %442 = vmatprep.subr.mxu0 0.0
      %443 = vmatpush2.msra.mxu0 0.0
      %444 = vmatprep.subr.mxu0 0.0
      %445 = vmatpush2.msra.mxu0 0.0
      %446 = vmatprep.subr.mxu0 0.0
      %447 = vmatpush2.msra.mxu0 0.0
      %448 = vmatprep.subr.mxu0 0.0
      %449 = vmatpush2.msra.mxu0 0.0
      %450 = vmatprep.subr.mxu0 0.0
      %451 = vmatpush2.msra.mxu0 0.0
      %452 = vmatprep.subr.mxu0 0.0
      %453 = vmatpush2.msra.mxu0 0.0
      %454 = vmatprep.subr.mxu0 0.0
      %455 = vmatpush2.msra.mxu0 0.0
      %456 = vmatprep.subr.mxu0 0.0
      %457 = vmatpush2.msra.mxu0 0.0
      %458 = vmatprep.subr.mxu0 0.0
      %459 = vmatpush2.msra.mxu0 0.0
      %460 = vmatprep.subr.mxu0 0.0
      %461 = vmatpush2.msra.mxu0 0.0
      %462 = vmatprep.mubr.f32.mxu0 0.0
      %463 = vmatmul.mubr.f32.gmra.mxu0 %v366
      %v464 = vpop.f32.mrf.mxu0
      %v465 = vadd.f32 0.0, %v464
      %v466 = vpop.f32.mrf.mxu0
      %467 = vmatprep.mubr.f32.mxu0 0.0
      %468 = vmatmul.mubr.f32.gmra.mxu0 %v367
      %v469 = vpop.f32.mrf.mxu0
      %v470 = vadd.f32 0.0, %v469
      %v471 = vpop.f32.mrf.mxu0
      %472 = vmatprep.mubr.f32.mxu0 0.0
      %473 = vmatmul.mubr.f32.gmra.mxu0 %v368
      %v474 = vpop.f32.mrf.mxu0
      %v475 = vadd.f32 0.0, %v474
      %v476 = vpop.f32.mrf.mxu0
      %477 = vmatprep.mubr.f32.mxu0 0.0
      %478 = vmatmul.mubr.f32.gmra.mxu0 %v369
      %v479 = vpop.f32.mrf.mxu0
      %v480 = vadd.f32 0.0, %v479
      %v481 = vpop.f32.mrf.mxu0
      %482 = vmatprep.mubr.f32.mxu0 0.0
      %483 = vmatmul.mubr.f32.gmra.mxu0 %v370
      %v484 = vpop.f32.mrf.mxu0
      %v485 = vadd.f32 0.0, %v484
      %v486 = vpop.f32.mrf.mxu0
      %487 = vmatprep.mubr.f32.mxu0 0.0
      %488 = vmatmul.mubr.f32.gmra.mxu0 %v371
      %v489 = vpop.f32.mrf.mxu0
      %v490 = vadd.f32 0.0, %v489
      %v491 = vpop.f32.mrf.mxu0
      %492 = vmatprep.mubr.f32.mxu0 0.0
      %493 = vmatmul.mubr.f32.gmra.mxu0 %v372
      %v494 = vpop.f32.mrf.mxu0
      %v495 = vadd.f32 0.0, %v494
      %v496 = vpop.f32.mrf.mxu0
      %497 = vmatprep.mubr.f32.mxu0 0.0
      %498 = vmatmul.mubr.f32.gmra.mxu0 %v373
      %v499 = vpop.f32.mrf.mxu0
      %v500 = vadd.f32 0.0, %v499
      %v501 = vpop.f32.mrf.mxu0
      %502 = vmatprep.mubr.f32.mxu0 0.0
      %503 = vmatmul.mubr.f32.gmra.mxu0 %v374
      %v504 = vpop.f32.mrf.mxu0
      %v505 = vadd.f32 0.0, %v504
      %v506 = vpop.f32.mrf.mxu0
      %507 = vmatprep.mubr.f32.mxu0 0.0
      %508 = vmatmul.mubr.f32.gmra.mxu0 %v375
      %v509 = vpop.f32.mrf.mxu0
      %v510 = vadd.f32 0.0, %v509
      %v511 = vpop.f32.mrf.mxu0
      %512 = vmatprep.mubr.f32.mxu0 0.0
      %513 = vmatmul.mubr.f32.gmra.mxu0 %v376
      %v514 = vpop.f32.mrf.mxu0
      %v515 = vadd.f32 0.0, %v514
      %v516 = vpop.f32.mrf.mxu0
      %517 = vmatprep.mubr.f32.mxu0 0.0
      %518 = vmatmul.mubr.f32.gmra.mxu0 %v377
      %v519 = vpop.f32.mrf.mxu0
      %v520 = vadd.f32 0.0, %v519
      %v521 = vpop.f32.mrf.mxu0
      %522 = vmatprep.mubr.f32.mxu0 0.0
      %523 = vmatmul.mubr.f32.gmra.mxu0 %v378
      %v524 = vpop.f32.mrf.mxu0
      %v525 = vadd.f32 0.0, %v524
      %v526 = vpop.f32.mrf.mxu0
      %527 = vmatprep.mubr.f32.mxu0 0.0
      %528 = vmatmul.mubr.f32.gmra.mxu0 %v379
      %v529 = vpop.f32.mrf.mxu0
      %v530 = vadd.f32 0.0, %v529
      %v531 = vpop.f32.mrf.mxu0
      %532 = vmatprep.mubr.f32.mxu0 0.0
      %533 = vmatmul.mubr.f32.gmra.mxu0 %v380
      %v534 = vpop.f32.mrf.mxu0
      %v535 = vadd.f32 0.0, %v534
      %v536 = vpop.f32.mrf.mxu0
      %537 = vmatprep.mubr.f32.mxu0 0.0
      %538 = vmatmul.mubr.f32.gmra.mxu0 %v381
      %v539 = vpop.f32.mrf.mxu0
      %v540 = vadd.f32 0.0, %v539
      %v541 = vpop.f32.mrf.mxu0
      %542 = vdwg.mxu0
      %v543 = vmax.f32 %v465, 0.0
      %v544 = vmax.f32 %v470, 0.0
      %v545 = vmax.f32 %v475, 0.0
      %v546 = vmax.f32 %v480, 0.0
      %v547 = vmax.f32 %v485, 0.0
      %v548 = vmax.f32 %v490, 0.0
      %v549 = vmax.f32 %v495, 0.0
      %v550 = vmax.f32 %v500, 0.0
      %v551 = vmax.f32 %v505, 0.0
      %v552 = vmax.f32 %v510, 0.0
      %v553 = vmax.f32 %v515, 0.0
      %v554 = vmax.f32 %v520, 0.0
      %v555 = vmax.f32 %v525, 0.0
      %v556 = vmax.f32 %v530, 0.0
      %v557 = vmax.f32 %v535, 0.0
      %v558 = vmax.f32 %v540, 0.0
      %v559 = vld [vmem:[%s1 + $0xb0] sm:$0xff]
      %v560 = vld [vmem:[%s1 + $0xb8] sm:$0xff]
      %v561 = vld [vmem:[%s1 + $0xc0] sm:$0xff]
      %v562 = vld [vmem:[%s1 + $0xc8] sm:$0xff]
      %v563 = vld [vmem:[%s1 + $0xd0] sm:$0xff]
      %v564 = vld [vmem:[%s1 + $0xd8] sm:$0xff]
      %v565 = vld [vmem:[%s1 + $0xe0] sm:$0xff]
      %v566 = vld [vmem:[%s1 + $0xe8] sm:$0xff]
      %v567 = vld [vmem:[%s1 + $0xf0] sm:$0xff]
      %v568 = vld [vmem:[%s1 + $0xf8] sm:$0xff]
      %v569 = vld [vmem:[%s1 + $0x100] sm:$0xff]
      %v570 = vld [vmem:[%s1 + $0x108] sm:$0xff]
      %v571 = vld [vmem:[%s1 + $0x110] sm:$0xff]
      %v572 = vld [vmem:[%s1 + $0x118] sm:$0xff]
      %v573 = vld [vmem:[%s1 + $0x120] sm:$0xff]
      %v574 = vld [vmem:[%s1 + $0x128] sm:$0xff]
      %v575 = vld [vmem:[%s1 + $0x130] sm:$0x1]
      %v576 = vlaneseq
      %v577 = vshrl.u32 %v576, 7
      %v578 = vsub.s32 0, %v577
      %v579 = vrot.slane %v575, %v578
      %580 = vmatprep.subr.mxu0 0.0
      %581 = vmatpush1.msra.mxu0 %v574
      %582 = vmatprep.subr.mxu0 0.0
      %583 = vmatpush1.msra.mxu0 %v573
      %584 = vmatprep.subr.mxu0 0.0
      %585 = vmatpush1.msra.mxu0 %v572
      %586 = vmatprep.subr.mxu0 0.0
      %587 = vmatpush1.msra.mxu0 %v571
      %588 = vmatprep.subr.mxu0 0.0
      %589 = vmatpush1.msra.mxu0 %v570
      %590 = vmatprep.subr.mxu0 0.0
      %591 = vmatpush1.msra.mxu0 %v569
      %592 = vmatprep.subr.mxu0 0.0
      %593 = vmatpush1.msra.mxu0 %v568
      %594 = vmatprep.subr.mxu0 0.0
      %595 = vmatpush1.msra.mxu0 %v567
      %596 = vmatprep.subr.mxu0 0.0
      %597 = vmatpush1.msra.mxu0 %v566
      %598 = vmatprep.subr.mxu0 0.0
      %599 = vmatpush1.msra.mxu0 %v565
      %600 = vmatprep.subr.mxu0 0.0
      %601 = vmatpush1.msra.mxu0 %v564
      %602 = vmatprep.subr.mxu0 0.0
      %603 = vmatpush1.msra.mxu0 %v563
      %604 = vmatprep.subr.mxu0 0.0
      %605 = vmatpush1.msra.mxu0 %v562
      %606 = vmatprep.subr.mxu0 0.0
      %607 = vmatpush1.msra.mxu0 %v561
      %608 = vmatprep.subr.mxu0 0.0
      %609 = vmatpush1.msra.mxu0 %v560
      %610 = vmatprep.subr.mxu0 0.0
      %611 = vmatpush1.msra.mxu0 %v559
      %612 = vmatprep.subr.mxu0 0.0
      %613 = vmatpush2.msra.mxu0 0.0
      %614 = vmatprep.subr.mxu0 0.0
      %615 = vmatpush2.msra.mxu0 0.0
      %616 = vmatprep.subr.mxu0 0.0
      %617 = vmatpush2.msra.mxu0 0.0
      %618 = vmatprep.subr.mxu0 0.0
      %619 = vmatpush2.msra.mxu0 0.0
      %620 = vmatprep.subr.mxu0 0.0
      %621 = vmatpush2.msra.mxu0 0.0
      %622 = vmatprep.subr.mxu0 0.0
      %623 = vmatpush2.msra.mxu0 0.0
      %624 = vmatprep.subr.mxu0 0.0
      %625 = vmatpush2.msra.mxu0 0.0
      %626 = vmatprep.subr.mxu0 0.0
      %627 = vmatpush2.msra.mxu0 0.0
      %628 = vmatprep.subr.mxu0 0.0
      %629 = vmatpush2.msra.mxu0 0.0
      %630 = vmatprep.subr.mxu0 0.0
      %631 = vmatpush2.msra.mxu0 0.0
      %632 = vmatprep.subr.mxu0 0.0
      %633 = vmatpush2.msra.mxu0 0.0
      %634 = vmatprep.subr.mxu0 0.0
      %635 = vmatpush2.msra.mxu0 0.0
      %636 = vmatprep.subr.mxu0 0.0
      %637 = vmatpush2.msra.mxu0 0.0
      %638 = vmatprep.subr.mxu0 0.0
      %639 = vmatpush2.msra.mxu0 0.0
      %640 = vmatprep.subr.mxu0 0.0
      %641 = vmatpush2.msra.mxu0 0.0
      %642 = vmatprep.subr.mxu0 0.0
      %643 = vmatpush2.msra.mxu0 0.0
      %644 = vmatprep.mubr.f32.mxu0 0.0
      %645 = vmatmul.mubr.f32.gmra.mxu0 %v543
      %v646 = vpop.f32.mrf.mxu0
      %v647 = vadd.f32 %v579, %v646
      %v648 = vpop.f32.mrf.mxu0
      %649 = vmatprep.mubr.f32.mxu0 0.0
      %650 = vmatmul.mubr.f32.gmra.mxu0 %v544
      %v651 = vpop.f32.mrf.mxu0
      %v652 = vadd.f32 %v579, %v651
      %v653 = vpop.f32.mrf.mxu0
      %654 = vmatprep.mubr.f32.mxu0 0.0
      %655 = vmatmul.mubr.f32.gmra.mxu0 %v545
      %v656 = vpop.f32.mrf.mxu0
      %v657 = vadd.f32 %v579, %v656
      %v658 = vpop.f32.mrf.mxu0
      %659 = vmatprep.mubr.f32.mxu0 0.0
      %660 = vmatmul.mubr.f32.gmra.mxu0 %v546
      %v661 = vpop.f32.mrf.mxu0
      %v662 = vadd.f32 %v579, %v661
      %v663 = vpop.f32.mrf.mxu0
      %664 = vmatprep.mubr.f32.mxu0 0.0
      %665 = vmatmul.mubr.f32.gmra.mxu0 %v547
      %v666 = vpop.f32.mrf.mxu0
      %v667 = vadd.f32 %v579, %v666
      %v668 = vpop.f32.mrf.mxu0
      %669 = vmatprep.mubr.f32.mxu0 0.0
      %670 = vmatmul.mubr.f32.gmra.mxu0 %v548
      %v671 = vpop.f32.mrf.mxu0
      %v672 = vadd.f32 %v579, %v671
      %v673 = vpop.f32.mrf.mxu0
      %674 = vmatprep.mubr.f32.mxu0 0.0
      %675 = vmatmul.mubr.f32.gmra.mxu0 %v549
      %v676 = vpop.f32.mrf.mxu0
      %v677 = vadd.f32 %v579, %v676
      %v678 = vpop.f32.mrf.mxu0
      %679 = vmatprep.mubr.f32.mxu0 0.0
      %680 = vmatmul.mubr.f32.gmra.mxu0 %v550
      %v681 = vpop.f32.mrf.mxu0
      %v682 = vadd.f32 %v579, %v681
      %v683 = vpop.f32.mrf.mxu0
      %684 = vmatprep.mubr.f32.mxu0 0.0
      %685 = vmatmul.mubr.f32.gmra.mxu0 %v551
      %v686 = vpop.f32.mrf.mxu0
      %v687 = vadd.f32 %v579, %v686
      %v688 = vpop.f32.mrf.mxu0
      %689 = vmatprep.mubr.f32.mxu0 0.0
      %690 = vmatmul.mubr.f32.gmra.mxu0 %v552
      %v691 = vpop.f32.mrf.mxu0
      %v692 = vadd.f32 %v579, %v691
      %v693 = vpop.f32.mrf.mxu0
      %694 = vmatprep.mubr.f32.mxu0 0.0
      %695 = vmatmul.mubr.f32.gmra.mxu0 %v553
      %v696 = vpop.f32.mrf.mxu0
      %v697 = vadd.f32 %v579, %v696
      %v698 = vpop.f32.mrf.mxu0
      %699 = vmatprep.mubr.f32.mxu0 0.0
      %700 = vmatmul.mubr.f32.gmra.mxu0 %v554
      %v701 = vpop.f32.mrf.mxu0
      %v702 = vadd.f32 %v579, %v701
      %v703 = vpop.f32.mrf.mxu0
      %704 = vmatprep.mubr.f32.mxu0 0.0
      %705 = vmatmul.mubr.f32.gmra.mxu0 %v555
      %v706 = vpop.f32.mrf.mxu0
      %v707 = vadd.f32 %v579, %v706
      %v708 = vpop.f32.mrf.mxu0
      %709 = vmatprep.mubr.f32.mxu0 0.0
      %710 = vmatmul.mubr.f32.gmra.mxu0 %v556
      %v711 = vpop.f32.mrf.mxu0
      %v712 = vadd.f32 %v579, %v711
      %v713 = vpop.f32.mrf.mxu0
      %714 = vmatprep.mubr.f32.mxu0 0.0
      %715 = vmatmul.mubr.f32.gmra.mxu0 %v557
      %v716 = vpop.f32.mrf.mxu0
      %v717 = vadd.f32 %v579, %v716
      %v718 = vpop.f32.mrf.mxu0
      %719 = vmatprep.mubr.f32.mxu0 0.0
      %720 = vmatmul.mubr.f32.gmra.mxu0 %v558
      %v721 = vpop.f32.mrf.mxu0
      %v722 = vadd.f32 %v579, %v721
      %v723 = vpop.f32.mrf.mxu0
      %724 = vdwg.mxu0
      %725 = vst [vmem:[%s145] sm:$0xff] %v647
      %726 = vst [vmem:[%s145 + $0x8] sm:$0xff] %v652
      %727 = vst [vmem:[%s145 + $0x10] sm:$0xff] %v657
      %728 = vst [vmem:[%s145 + $0x18] sm:$0xff] %v662
      %729 = vst [vmem:[%s145 + $0x20] sm:$0xff] %v667
      %730 = vst [vmem:[%s145 + $0x28] sm:$0xff] %v672
      %731 = vst [vmem:[%s145 + $0x30] sm:$0xff] %v677
      %732 = vst [vmem:[%s145 + $0x38] sm:$0xff] %v682
      %733 = vst [vmem:[%s145 + $0x40] sm:$0xff] %v687
      %734 = vst [vmem:[%s145 + $0x48] sm:$0xff] %v692
      %735 = vst [vmem:[%s145 + $0x50] sm:$0xff] %v697
      %736 = vst [vmem:[%s145 + $0x58] sm:$0xff] %v702
      %737 = vst [vmem:[%s145 + $0x60] sm:$0xff] %v707
      %738 = vst [vmem:[%s145 + $0x68] sm:$0xff] %v712
      %739 = vst [vmem:[%s145 + $0x70] sm:$0xff] %v717
      %740 = vst [vmem:[%s145 + $0x78] sm:$0xff] %v722
      %s741 = smul.u32 16, %s13
      %p742 = scmp.lt.s32.totalorder %s741, 31
      %s743 = scalar_select %p742, %s741, 31
      %s744 = smul.addr %s743, 8
      %s745 = scalar_lea.vmem %s2, %s744
      // Predicated region
      $region29: #{fwd.1} parent=27 // pred_check
        %p746 = pneg %p78
      $region30: #{fwd.1} parent=27 // pred_check_branch
        %748 = sbr.rel (%p746) target = $region32
      $region31: #{fwd.1} parent=27 // pred_region
        %s749 = smul.u32 16, %s13
      $region32: #{fwd.1} parent=27 // pred_fallthru
        _
    $region28: #{fwd.1} parent=5 // pred_fallthru
      _
    %p750 = scmp.le.s32.totalorder 2, %s8
    // Predicated region
    $region33: #{fwd.1} parent=5 // pred_check
      %p751 = pneg %p750
    $region34: #{fwd.1} parent=5 // pred_check_branch
      %753 = sbr.rel (%p751) target = $region36
    $region35: #{fwd.1} parent=5 // pred_region
      %s754 = ssub.s32 %s8, 2
      // Predicated region
      $region37: #{fwd.1} parent=35 // pred_check
        %p755 = pneg %p84
      $region38: #{fwd.1} parent=35 // pred_check_branch
        %757 = sbr.rel (%p755) target = $region40
      $region39: #{fwd.1} parent=35 // pred_region
        %s758 = smul.u32 16, %s14
        %p759 = scmp.lt.s32.totalorder %s758, 31
        %s760 = scalar_select %p759, %s758, 31
        %s761 = smul.addr %s760, 8
        %s762 = scalar_lea.vmem %s2, %s761
      $region40: #{fwd.1} parent=35 // pred_fallthru
        _
    $region36: #{fwd.1} parent=5 // pred_fallthru
      _
  $region6: #{fwd.1} parent=0 // loop_footer
    %s12 = sadd.s32 1, %s8
  $region7: #{fwd.1} parent=0 // loop_footer_branch
    %7 = sbr.rel target = $region3
  $region8: #{fwd.1} parent=0 // loop_exit
    _

</llo_original>
